<compile_context>
chip_gen: v7x
topology: tpu7x:2x2x1
jax: 0.10.0
libtpu: 0.0.40
codegen_flags: <defaults>
</compile_context>

<pallas_src>
import functools
import math

import jax
import jax.numpy as jnp
from jax.experimental import pallas as pl
from jax.experimental.pallas import tpu as pltpu


# --------------------------------------------------------------------------- #
# 1D SPE kernel: tokens (b, seq) -> embeddings (b, seq, emb_dim)
# --------------------------------------------------------------------------- #
def _spe1d_kernel(tok_ref, out_ref, *, padding_idx, half_dim, div_half_dim):
    # tok_ref : (1, 1, S) int32   (one batch row, tokens on the lane axis)
    # out_ref : (1, S, E) float32 (seq on sublanes, emb_dim on lanes)
    s = out_ref.shape[1]
    tok = tok_ref[0]                                               # (1, S)
    mask_row = (tok != padding_idx).astype(jnp.float32)            # (1, S)

    s_idx = jax.lax.broadcasted_iota(jnp.int32, (s, s), 0)         # output position
    t_idx = jax.lax.broadcasted_iota(jnp.int32, (s, s), 1)         # source position
    incl = (t_idx <= s_idx).astype(jnp.float32)                    # inclusive prefix
    diag = (t_idx == s_idx).astype(jnp.float32)

    # cumsum along the sequence (landing on sublanes) and the mask "transpose",
    # both as masked lane reductions -> no MXU matmul, no relayout.
    csum = jnp.sum(mask_row * incl, axis=1, keepdims=True)         # (S, 1)
    mask = jnp.sum(mask_row * diag, axis=1, keepdims=True)         # (S, 1)
    pos = csum * mask + float(padding_idx)                         # make_positions

    denom = (half_dim - 1) if not div_half_dim else half_dim
    scale = math.log(10000.0) / float(denom)
    k = jax.lax.broadcasted_iota(jnp.int32, (1, half_dim), 1).astype(jnp.float32)
    inv_freq = jnp.exp(-scale * k)                                 # (1, half)

    ang = pos * inv_freq                                           # (S, half)
    emb = jnp.concatenate([jnp.sin(ang), jnp.cos(ang)], axis=-1)   # (S, E)
    # padding positions get the zeroed embedding row, exactly like the table
    out_ref[0] = (emb * mask).astype(out_ref.dtype)


# --------------------------------------------------------------------------- #
# 2D SPE grid kernel: writes one (1, 2E, TH, W) block of the (B, 2E, H, W) grid
# --------------------------------------------------------------------------- #
def _spe2d_grid_kernel(freq_ref, o_ref, *, padding_idx, h_shift, w_shift):
    # freq_ref : (half, 1, 1) f32  -- inv_freq[k] = exp(-k * log(1e4)/denom)
    # o_ref    : (1, 2*E, TH, W)   -- NCHW output block (row-tiled over H)
    half = freq_ref.shape[0]
    emb_dim = 2 * half
    th = o_ref.shape[2]
    w = o_ref.shape[3]
    inv_freq = freq_ref[...]                                       # (half, 1, 1)

    # ---- x (width) axis: axis values arange(1, W+1) + w_shift, vary along lanes
    j = jax.lax.broadcasted_iota(jnp.int32, (1, 1, w), 2)          # global column idx
    mask_x = ((j + (1 + w_shift)) != padding_idx).astype(jnp.float32)
    csum_x = j + 1                                                 # cumsum of the mask:
    j0 = padding_idx - 1 - w_shift                                 # only one column can hit pad
    if j0 >= 0:
        csum_x = csum_x - (j >= j0).astype(jnp.int32)
    pos_x = csum_x.astype(jnp.float32) * mask_x + float(padding_idx)   # (1, 1, W)
    ang_x = inv_freq * pos_x                                           # (half, 1, W)
    sin_x = jnp.sin(ang_x) * mask_x
    cos_x = jnp.cos(ang_x) * mask_x
    o_ref[:, 0:half, :, :] = jnp.broadcast_to(sin_x, (1, half, th, w)).astype(o_ref.dtype)
    o_ref[:, half:emb_dim, :, :] = jnp.broadcast_to(cos_x, (1, half, th, w)).astype(o_ref.dtype)

    # ---- y (height) axis: axis values arange(1, H+1) + h_shift, vary along sublanes
    row0 = pl.program_id(1) * th
    i = jax.lax.broadcasted_iota(jnp.int32, (1, th, 1), 1) + row0  # global row idx
    mask_y = ((i + (1 + h_shift)) != padding_idx).astype(jnp.float32)
    csum_y = i + 1
    i0 = padding_idx - 1 - h_shift
    if i0 >= 0:
        csum_y = csum_y - (i >= i0).astype(jnp.int32)
    pos_y = csum_y.astype(jnp.float32) * mask_y + float(padding_idx)   # (1, TH, 1)
    ang_y = inv_freq * pos_y                                           # (half, TH, 1)
    sin_y = jnp.sin(ang_y) * mask_y
    cos_y = jnp.cos(ang_y) * mask_y
    o_ref[:, emb_dim:emb_dim + half, :, :] = jnp.broadcast_to(
        sin_y, (1, half, th, w)).astype(o_ref.dtype)
    o_ref[:, emb_dim + half:2 * emb_dim, :, :] = jnp.broadcast_to(
        cos_y, (1, half, th, w)).astype(o_ref.dtype)


# --------------------------------------------------------------------------- #
# Module-like wrapper
# --------------------------------------------------------------------------- #
def _center_shifts(h, w, center_shift):
    if center_shift is None:
        return 0, 0
    h_shift = center_shift - (h // 2 if h % 2 == 0 else h // 2 + 1)
    w_shift = center_shift - (w // 2 if w % 2 == 0 else w // 2 + 1)
    return int(h_shift), int(w_shift)


class SinusoidalPositionalEmbeddingPallas:
    """Pallas-TPU forward of basicsr SinusoidalPositionalEmbedding (SPE / SPE2d)."""

    def __init__(self, embedding_dim, padding_idx, init_size=1024,
                 div_half_dim=False, center_shift=None):
        assert embedding_dim % 2 == 0, "embedding_dim must be even"
        self.embedding_dim = int(embedding_dim)
        self.padding_idx = int(padding_idx)
        self.div_half_dim = bool(div_half_dim)
        self.center_shift = center_shift
        # NOTE: no `weights` buffer / lazy regrowth needed -- the sinusoid is
        # evaluated in-kernel, which is numerically identical to the table.
        # TODO(synk): running PyTorch buffer bookkeeping (_float_tensor device tracking) has no JAX equivalent / is unnecessary.

    def _inv_freq(self):
        half = self.embedding_dim // 2
        denom = (half - 1) if not self.div_half_dim else half
        scale = math.log(10000.0) / float(denom)
        return jnp.exp(-scale * jnp.arange(half, dtype=jnp.float32))

    # ----- forward for [b, seq] token ids -> [b, seq, emb_dim]
    def _forward_1d(self, tokens):
        b, s = tokens.shape
        half = self.embedding_dim // 2
        tok3 = tokens.astype(jnp.int32).reshape(b, 1, s)
        kern = functools.partial(_spe1d_kernel, padding_idx=self.padding_idx,
                                 half_dim=half, div_half_dim=self.div_half_dim)
        return pl.pallas_call(
            kern,
            out_shape=jax.ShapeDtypeStruct((b, s, self.embedding_dim), jnp.float32),
            grid=(b,),
            in_specs=[pl.BlockSpec((1, 1, s), lambda i: (i, 0, 0))],
            out_specs=pl.BlockSpec((1, s, self.embedding_dim), lambda i: (i, 0, 0)),
            compiler_params=pltpu.CompilerParams(dimension_semantics=("parallel",)),
        )(tok3)

    # ----- SPE2d grid: (B, 2*emb_dim, H, W), written directly by the kernel
    def make_grid2d(self, height, width, num_batches=1, center_shift=None,
                    dtype=jnp.float32):
        if center_shift is None:
            center_shift = self.center_shift
        h_shift, w_shift = _center_shifts(height, width, center_shift)
        half = self.embedding_dim // 2
        e2 = 2 * self.embedding_dim
        th = 8 if height % 8 == 0 else height          # sublane-aligned row tile
        inv_freq = self._inv_freq().reshape(half, 1, 1)
        kern = functools.partial(_spe2d_grid_kernel, padding_idx=self.padding_idx,
                                 h_shift=h_shift, w_shift=w_shift)
        return pl.pallas_call(
            kern,
            out_shape=jax.ShapeDtypeStruct((num_batches, e2, height, width), dtype),
            grid=(num_batches, height // th),
            in_specs=[pl.BlockSpec((half, 1, 1), lambda b, r: (0, 0, 0))],
            out_specs=pl.BlockSpec((1, e2, th, width), lambda b, r: (b, 0, r, 0)),
            compiler_params=pltpu.CompilerParams(
                dimension_semantics=("parallel", "parallel")),
        )(inv_freq)

    def make_grid2d_like(self, x, center_shift=None):
        h, w = x.shape[-2], x.shape[-1]
        return self.make_grid2d(h, w, x.shape[0], center_shift, dtype=x.dtype)

    def __call__(self, x, **kwargs):
        assert x.ndim in (2, 4), "Input dimension should be 2 (1D) or 4 (2D)"
        if x.ndim == 4:
            return self.make_grid2d_like(x, **kwargs)
        return self._forward_1d(x)


# --------------------------------------------------------------------------- #
# Pure-JAX reference (mirrors the PyTorch module)
# --------------------------------------------------------------------------- #
def _ref_get_embedding(num_embeddings, embedding_dim, padding_idx=None, div_half_dim=False):
    half = embedding_dim // 2
    denom = (half - 1) if not div_half_dim else half
    scale = math.log(10000.0) / float(denom)
    freq = jnp.exp(jnp.arange(half, dtype=jnp.float32) * -scale)
    ang = jnp.arange(num_embeddings, dtype=jnp.float32)[:, None] * freq[None, :]
    emb = jnp.concatenate([jnp.sin(ang), jnp.cos(ang)], axis=1)
    if padding_idx is not None:
        emb = emb.at[padding_idx].set(0.0)
    return emb


def _ref_spe1d(tokens, embedding_dim, padding_idx, div_half_dim=False):
    b, s = tokens.shape
    table = _ref_get_embedding(int(padding_idx) + s + 66, embedding_dim,
                               padding_idx, div_half_dim)
    mask = (tokens != padding_idx).astype(jnp.int32)
    positions = jnp.cumsum(mask, axis=1) * mask + padding_idx
    return table[positions]


def _ref_grid2d(h, w, num_batches, embedding_dim, padding_idx,
                div_half_dim=False, center_shift=None):
    h_shift, w_shift = _center_shifts(h, w, center_shift)
    x_axis = jnp.broadcast_to(
        jnp.arange(1, w + 1, dtype=jnp.int32)[None, :] + w_shift, (num_batches, w))
    y_axis = jnp.broadcast_to(
        jnp.arange(1, h + 1, dtype=jnp.int32)[None, :] + h_shift, (num_batches, h))
    x_emb = _ref_spe1d(x_axis, embedding_dim, padding_idx, div_half_dim).transpose(0, 2, 1)
    y_emb = _ref_spe1d(y_axis, embedding_dim, padding_idx, div_half_dim).transpose(0, 2, 1)
    x_grid = jnp.broadcast_to(x_emb[:, :, None, :], (num_batches, embedding_dim, h, w))
    y_grid = jnp.broadcast_to(y_emb[:, :, :, None], (num_batches, embedding_dim, h, w))
    return jnp.concatenate([x_grid, y_grid], axis=1)


# --------------------------------------------------------------------------- #
if __name__ == "__main__":
    key = jax.random.PRNGKey(0)
    k_tok, k_x = jax.random.split(key)

    emb_dim, pad_idx = 32, 0
    spe = SinusoidalPositionalEmbeddingPallas(emb_dim, pad_idx, init_size=1024)

    # --- 1D SPE: token ids (b, seq); zeros are padding positions ---
    B, S = 2, 8
    tokens = jax.random.randint(k_tok, (B, S), 0, 5, dtype=jnp.int32)
    out1d = spe(tokens)
    jax.block_until_ready(out1d)
    assert out1d.shape == (B, S, emb_dim), out1d.shape
    ref1d = _ref_spe1d(tokens, emb_dim, pad_idx)
    assert jnp.allclose(out1d, ref1d, atol=1e-3), float(jnp.max(jnp.abs(out1d - ref1d)))

    # --- 2D SPE grid from a 4D feature map (b, c, h, w) ---
    Bc, C, H, W = 2, 4, 16, 16
    x = jax.random.normal(k_x, (Bc, C, H, W), dtype=jnp.float32)
    out2d = spe(x)
    jax.block_until_ready(out2d)
    assert out2d.shape == (Bc, 2 * emb_dim, H, W), out2d.shape
    ref2d = _ref_grid2d(H, W, Bc, emb_dim, pad_idx)
    assert jnp.allclose(out2d, ref2d, atol=1e-3), float(jnp.max(jnp.abs(out2d - ref2d)))

    # --- 2D SPE grid with a center shift (exercises the padded axis value path) ---
    spe_cs = SinusoidalPositionalEmbeddingPallas(emb_dim, pad_idx, center_shift=4)
    out2d_cs = spe_cs(x)
    jax.block_until_ready(out2d_cs)
    ref2d_cs = _ref_grid2d(H, W, Bc, emb_dim, pad_idx, center_shift=4)
    assert jnp.allclose(out2d_cs, ref2d_cs, atol=1e-3), \
        float(jnp.max(jnp.abs(out2d_cs - ref2d_cs)))

    print("KERNEL_OK")
</pallas_src>

<mosaic_0001>
module attributes {stable_mosaic.version = 11 : i64} {
  func.func @_spe1d_kernel(%arg0: i32, %arg1: memref<1x1x8xi32, #tpu.memory_space<vmem>>, %arg2: memref<1x8x32xf32, #tpu.memory_space<vmem>>) attributes {dimension_semantics = [#tpu.dimension_semantics<parallel>], iteration_bounds = array<i64: 2>, scalar_prefetch = 0 : i64, scratch_operands = 0 : i64, tpu.core_type = #tpu.core_type<tc>, window_params = [{transform_indices = @transform_0, window_bounds = array<i64: 1, 1, 8>}, {transform_indices = @transform_1, window_bounds = array<i64: 1, 8, 32>}]} {
    %c0 = arith.constant 0 : index
    %c0_0 = arith.constant 0 : index
    %c0_1 = arith.constant 0 : index
    %0 = vector.load %arg1[%c0, %c0_0, %c0_1] : memref<1x1x8xi32, #tpu.memory_space<vmem>>, vector<1x1x8xi32>
    %1 = vector.shape_cast %0 : vector<1x1x8xi32> to vector<1x8xi32>
    %c0_i32 = arith.constant 0 : i32
    %2 = vector.broadcast %c0_i32 : i32 to vector<1x8xi32>
    %3 = arith.cmpi ne, %1, %2 : vector<1x8xi32>
    %4 = arith.extui %3 : vector<1x8xi1> to vector<1x8xi32>
    %5 = arith.sitofp %4 : vector<1x8xi32> to vector<1x8xf32>
    %6 = tpu.iota {dimensions = array<i32: 0>} : vector<8x8xi32>
    %7 = tpu.iota {dimensions = array<i32: 1>} : vector<8x8xi32>
    %8 = arith.cmpi sle, %7, %6 : vector<8x8xi32>
    %9 = arith.extui %8 : vector<8x8xi1> to vector<8x8xi32>
    %10 = arith.sitofp %9 : vector<8x8xi32> to vector<8x8xf32>
    %11 = arith.cmpi eq, %7, %6 : vector<8x8xi32>
    %12 = arith.extui %11 : vector<8x8xi1> to vector<8x8xi32>
    %13 = arith.sitofp %12 : vector<8x8xi32> to vector<8x8xf32>
    %14 = vector.broadcast %5 : vector<1x8xf32> to vector<8x8xf32>
    %15 = arith.mulf %14, %10 : vector<8x8xf32>
    %cst = arith.constant dense<0.000000e+00> : vector<8xf32>
    %16 = vector.multi_reduction <add>, %15, %cst [1] : vector<8x8xf32> to vector<8xf32>
    %17 = vector.shape_cast %16 : vector<8xf32> to vector<8x1xf32>
    %18 = vector.broadcast %5 : vector<1x8xf32> to vector<8x8xf32>
    %19 = arith.mulf %18, %13 : vector<8x8xf32>
    %cst_2 = arith.constant dense<0.000000e+00> : vector<8xf32>
    %20 = vector.multi_reduction <add>, %19, %cst_2 [1] : vector<8x8xf32> to vector<8xf32>
    %21 = vector.shape_cast %20 : vector<8xf32> to vector<8x1xf32>
    %22 = arith.mulf %17, %21 : vector<8x1xf32>
    %cst_3 = arith.constant 0.000000e+00 : f32
    %23 = vector.broadcast %cst_3 : f32 to vector<8x1xf32>
    %24 = arith.addf %22, %23 : vector<8x1xf32>
    %25 = tpu.iota {dimensions = array<i32: 1>} : vector<1x16xi32>
    %26 = arith.sitofp %25 : vector<1x16xi32> to vector<1x16xf32>
    %cst_4 = arith.constant -0.614022672 : f32
    %27 = vector.broadcast %cst_4 : f32 to vector<1x16xf32>
    %28 = arith.mulf %27, %26 : vector<1x16xf32>
    %29 = math.exp %28 : vector<1x16xf32>
    %30 = vector.broadcast %24 : vector<8x1xf32> to vector<8x16xf32>
    %31 = vector.broadcast %29 : vector<1x16xf32> to vector<8x16xf32>
    %32 = arith.mulf %30, %31 : vector<8x16xf32>
    %33 = math.sin %32 : vector<8x16xf32>
    %34 = math.cos %32 : vector<8x16xf32>
    %35 = tpu.concatenate %33, %34 in 1 : vector<8x16xf32>, vector<8x16xf32> -> vector<8x32xf32>
    %36 = vector.broadcast %21 : vector<8x1xf32> to vector<8x32xf32>
    %37 = arith.mulf %35, %36 : vector<8x32xf32>
    %c0_5 = arith.constant 0 : index
    %c0_6 = arith.constant 0 : index
    %c0_7 = arith.constant 0 : index
    %38 = vector.load %arg2[%c0_5, %c0_6, %c0_7] : memref<1x8x32xf32, #tpu.memory_space<vmem>>, vector<1x8x32xf32>
    %39 = vector.shape_cast %38 : vector<1x8x32xf32> to vector<8x32xf32>
    %40 = vector.shape_cast %37 : vector<8x32xf32> to vector<1x8x32xf32>
    tpu.vector_store %arg2[%c0_5, %c0_6, %c0_7], %40 {strides = array<i32>} : memref<1x8x32xf32, #tpu.memory_space<vmem>>, vector<1x8x32xf32>,
    return
  }
  func.func @transform_0(%arg0: i32) -> (i32, i32, i32) {
    %c0_i32 = arith.constant 0 : i32
    %c0_i32_0 = arith.constant 0 : i32
    %c0_i32_1 = arith.constant 0 : i32
    return %arg0, %c0_i32, %c0_i32_0 : i32, i32, i32
  }
  func.func @transform_1(%arg0: i32) -> (i32, i32, i32) {
    %c0_i32 = arith.constant 0 : i32
    %c0_i32_0 = arith.constant 0 : i32
    %c0_i32_1 = arith.constant 0 : i32
    return %arg0, %c0_i32, %c0_i32_0 : i32, i32, i32
  }
}

</mosaic_0001>

<llo_original>
// kernel: tpu_custom_call.1
$region0: #{tpu_custom_call.1}
  #allocation0 [shape = 'u32[]', space=smem, size = 0x4, offset = 0x4, fixed_abs, tag = 'smem constant byte address 0x4 - core index']
  #allocation1 [shape = 'u32[144,128]{1,0:T(1,128)}', space=vmem, size = 0x12000, scoped, tag = 'internal scratch']
  %s0 = inlined_call_operand.hbm [shape: s32[2,1,8], index: 0, kind: input, shape index: {}]
  %s1 = inlined_call_operand.hbm [shape: f32[2,8,32], index: 1, kind: output, shape index: {}]
  %s2 = sld [smem:[#allocation0]]
  $region41: #{tpu_custom_call.1} parent=0
    _
  %s4 = ssub.s32 1, %s2
  %s5 = scalar_select 0, %s4, %s2
  $region1: #{tpu_custom_call.1} parent=0
    #allocation2 [shape = 'u8[1024]{0}', space=vmem, size = 0x400, scoped, tag = 'input window, operand 0']
    #allocation3 [shape = 's32[2]{0}', space=sflag, size = 0x8, scoped, tag = 'scoped memory for tpu_custom_call.1']
    #allocation4 [shape = 's32[2]{0}', space=sflag, size = 0x8, scoped, tag = 'scoped memory for tpu_custom_call.1']
    #allocation5 [shape = 'u8[8192]{0}', space=vmem, size = 0x2000, scoped, tag = 'output window, operand 0']
    %6 = vsyncpa [#allocation3], 0
    %s7 = scalar_lea.sflag [#allocation3], 1
    %8 = vsyncpa %s7, 0
    %9 = vsyncpa [#allocation4], 0
    %s10 = scalar_lea.sflag [#allocation4], 1
    %11 = vsyncpa %s10, 0
    loop: start=0, step=1, limit=4
    $region2: #{tpu_custom_call.1} parent=1 // loop_pre_header
      _
    $region3: #{tpu_custom_call.1} parent=1 // loop_header
      %s13 = sphi 0, %s17
      %p14 = scmp.ge.s32.totalorder %s13, 4
      %s23 = sphi 0, %s25
      %s26 = sphi 0, %s23
      %s27 = sphi 0, %s26
      %s43 = sphi 0, %s27
      %s49 = sphi 0, %s51
      %s52 = sphi 0, %s49
      %s53 = sphi 0, %s52
      %s69 = sphi 0, %s53
    $region4: #{tpu_custom_call.1} parent=1 // loop_header_branch
      %16 = sbr.rel (%p14) target = $region8
    $region5: #{tpu_custom_call.1} parent=1 // loop_body
      %s18 = ssub.s32 %s13, 1
      %s19 = ssub.s32 %s13, 2
      %s20 = sadd.s32 %s13, 1
      %s21 = ssub.s32 %s13, %s20
      %p22 = scmp.eq.s32.totalorder %s21, 0
      %s24 = sadd.s32 %s23, 1
      %s25 = scalar_select %p22, %s23, %s24
      %p28 = pneg %p22
      %p29 = scmp.eq.s32.totalorder %s13, 1
      %p30 = por %p28, %p29
      %p31 = scmp.ne.s32.totalorder %s23, %s26
      %p32 = scmp.eq.s32.totalorder %s13, 0
      %p33 = por %p31, %p32
      %p34 = scmp.ne.s32.totalorder %s23, %s26
      %p35 = scmp.eq.s32.totalorder %s18, 1
      %p36 = por %p34, %p35
      %p37 = scmp.ne.s32.totalorder %s26, %s27
      %p38 = scmp.eq.s32.totalorder %s18, 0
      %p39 = por %p37, %p38
      %p40 = scmp.ne.s32.totalorder %s26, %s27
      %p41 = scmp.eq.s32.totalorder %s19, 1
      %p42 = por %p40, %p41
      %p44 = scmp.ne.s32.totalorder %s27, %s43
      %p45 = scmp.eq.s32.totalorder %s19, 0
      %p46 = por %p44, %p45
      %s47 = ssub.s32 %s13, %s20
      %p48 = scmp.eq.s32.totalorder %s47, 0
      %s50 = sadd.s32 %s49, 1
      %s51 = scalar_select %p48, %s49, %s50
      %p54 = pneg %p48
      %p55 = scmp.eq.s32.totalorder %s13, 1
      %p56 = por %p54, %p55
      %p57 = scmp.ne.s32.totalorder %s49, %s52
      %p58 = scmp.eq.s32.totalorder %s13, 0
      %p59 = por %p57, %p58
      %p60 = scmp.ne.s32.totalorder %s49, %s52
      %p61 = scmp.eq.s32.totalorder %s18, 1
      %p62 = por %p60, %p61
      %p63 = scmp.ne.s32.totalorder %s52, %s53
      %p64 = scmp.eq.s32.totalorder %s18, 0
      %p65 = por %p63, %p64
      %p66 = scmp.ne.s32.totalorder %s52, %s53
      %p67 = scmp.eq.s32.totalorder %s19, 1
      %p68 = por %p66, %p67
      %p70 = scmp.ne.s32.totalorder %s53, %s69
      %p71 = scmp.eq.s32.totalorder %s19, 0
      %p72 = por %p70, %p71
      %p73 = scmp.le.s32.totalorder 1, %s13
      %p74 = scmp.lt.s32.totalorder %s13, 3
      %p75 = pnand %p73, %p74
      %p76 = pneg %p75
      // Predicated region
      $region9: #{tpu_custom_call.1} parent=5 // pred_check
        _
      $region10: #{tpu_custom_call.1} parent=5 // pred_check_branch
        %78 = sbr.rel (%p75) target = $region12
      $region11: #{tpu_custom_call.1} parent=5 // pred_region
        %s79 = ssub.s32 %s13, 1
      $region12: #{tpu_custom_call.1} parent=5 // pred_fallthru
        _
      %p80 = scmp.lt.s32.totalorder %s13, 2
      // Predicated region
      $region13: #{tpu_custom_call.1} parent=5 // pred_check
        %p81 = pneg %p80
      $region14: #{tpu_custom_call.1} parent=5 // pred_check_branch
        %83 = sbr.rel (%p81) target = $region16
      $region15: #{tpu_custom_call.1} parent=5 // pred_region
        // Predicated region
        $region17: #{tpu_custom_call.1} parent=15 // pred_check
          %p84 = pneg %p33
        $region18: #{tpu_custom_call.1} parent=15 // pred_check_branch
          %86 = sbr.rel (%p84) target = $region20
        $region19: #{tpu_custom_call.1} parent=15 // pred_region
          %s87 = sand.u32 %s23, 1
          %s88 = scalar_lea.sflag [#allocation3], %s87
          %s89 = sand.u32 %s23, 1
          %s90 = scalar_lea.vmem [#allocation2], %s89
          %s92 = ssub.s32 16, 16
          %93 = vsyncadd %s88, %s92
          %s94 = smul.addr %s13, 16
          %s95 = scalar_lea.hbm %s0, %s94
          %s97 = sshll.u32 %s90, 4
          %s98 = int_to_ptr.vmem [resolvable:$true] %s97
          %100 = dma.hbm_to_vmem [thread:$0]  %s95, 16, %s98, %s88
        $region20: #{tpu_custom_call.1} parent=15 // pred_fallthru
          _
      $region16: #{tpu_custom_call.1} parent=5 // pred_fallthru
        _
      %p101 = scmp.le.s32.totalorder 1, %s13
      %p102 = scmp.lt.s32.totalorder %s13, 3
      %p103 = pnand %p101, %p102
      %p104 = pneg %p103
      // Predicated region
      $region21: #{tpu_custom_call.1} parent=5 // pred_check
        _
      $region22: #{tpu_custom_call.1} parent=5 // pred_check_branch
        %106 = sbr.rel (%p103) target = $region24
      $region23: #{tpu_custom_call.1} parent=5 // pred_region
        %s107 = ssub.s32 %s13, 1
        %s108 = sand.u32 %s26, 1
        %s109 = scalar_lea.sflag [#allocation3], %s108
        %s110 = sand.u32 %s26, 1
        %s111 = scalar_lea.vmem [#allocation2], %s110
        // Predicated region
        $region25: #{tpu_custom_call.1} parent=23 // pred_check
          %p112 = pneg %p39
        $region26: #{tpu_custom_call.1} parent=23 // pred_check_branch
          %114 = sbr.rel (%p112) target = $region28
        $region27: #{tpu_custom_call.1} parent=23 // pred_region
          %115 = dma.done %s109, 16
        $region28: #{tpu_custom_call.1} parent=23 // pred_fallthru
          _
        %s116 = sand.u32 %s26, 1
        %s117 = scalar_lea.sflag [#allocation3], %s116
        %s118 = sand.u32 %s26, 1
        %s119 = scalar_lea.vmem [#allocation2], %s118
        %p120 = pneg %p39
        %p121 = pneg %p36
        %p122 = pneg %p65
        %p123 = pneg %p62
        %s124 = sand.u32 %s52, 1
        %s125 = scalar_lea.sflag [#allocation4], %s124
        %s126 = sand.u32 %s52, 1
        %s127 = smul.addr %s126, 8
        %s128 = scalar_lea.vmem [#allocation5], %s127
        %v129 = vld [vmem:[%s111] sm:$0x1]
        %vm130 = vcmp.ne.s32.totalorder %v129, 0
        %v131 = vsel %vm130, 1, 0
        %v132 = vcvt.s32.f32 %v131
        %v133 = vlaneseq
        %v134 = vshrl.u32 %v133, 7
        %v135 = vlaneseq
        %v136 = vand.u32 %v135, 127
        %vm137 = vcmp.le.s32.totalorder %v136, %v134
        %v138 = vsel %vm137, 1, 0
        %v139 = vcvt.s32.f32 %v138
        %vm140 = vcmp.eq.s32.totalorder %v136, %v134
        %v141 = vsel %vm140, 1, 0
        %v142 = vcvt.s32.f32 %v141
        %v144 = vlaneseq
        %v145 = vshrl.u32 %v144, 7
        %v146 = vsub.s32 0, %v145
        %v147 = vrot.slane %v132, %v146
        %v149 = vmul.f32 %v147, %v139
        %vm150 = vcmask 64512
        %v151 = vsel %vm150, %v149, 0.0
        %152 = vadd.xlane.f32.xlu0 %v151
        %v153 = vpop.xlane.xlu0 %152
        %v154 = vmul.f32 %v147, %v142
        %v155 = vsel %vm150, %v154, 0.0
        %156 = vadd.xlane.f32.xlu0 %v155
        %v157 = vpop.xlane.xlu0 %156
        %v158 = vmul.f32 %v153, %v157
        %v159 = vadd.f32 %v158, 0.0
        %v160 = vcvt.s32.f32 %v136
        %v161 = vmul.f32 %v160, -0.6140227
        %v162 = vmul.f32 %v161, 1.442695
        %v163 = vpow.pop %v162
        %v164 = vmul.f32 %v159, %v163
        %v165 = vand.u32 2147483647, %v164
        %vm166 = vcmp.le.f32.partialorder %v165, 0.7853982
        %vm167 = vcmp.lt.s32.totalorder %v164, 0
        %v168 = vand.u32 %v164, 2139095040
        %v169 = vshrl.u32 %v168, 23
        %v170 = vsub.s32 %v169, 127
        %v171 = vand.u32 2147483647, %v164
        %v172 = vand.u32 %v171, 8388607
        %v173 = vor.u32 %v172, 8388608
        %v174 = vsub.s32 0, %v173
        %v175 = vadd.s32 %v170, 1
        %vm176 = vcmp.gt.s32.totalorder %v175, 0
        %v177 = vsel %vm176, %v175, 0
        %v178 = vshrl.u32 %v177, 5
        %v179 = vand.u32 %v177, 31
        %v180 = vsub.s32 32, %v179
        %v181 = vshrl.u32 683565275, %v180
        %v182 = vshll.u32 683565275, %v179
        %v183 = vshrl.u32 2475754826, %v180
        %v184 = vor.u32 %v182, %v183
        %v185 = vshll.u32 2475754826, %v179
        %v186 = vshrl.u32 2131351028, %v180
        %v187 = vor.u32 %v185, %v186
        %v188 = vshll.u32 2131351028, %v179
        %v189 = vshrl.u32 2102212464, %v180
        %v190 = vor.u32 %v188, %v189
        %v191 = vshll.u32 2102212464, %v179
        %v192 = vshrl.u32 920167782, %v180
        %v193 = vor.u32 %v191, %v192
        %v194 = vshll.u32 920167782, %v179
        %v195 = vshrl.u32 1326507024, %v180
        %v196 = vor.u32 %v194, %v195
        %vm197 = vcmp.lt.s32.totalorder %v178, 1
        %vm198 = vcmp.lt.s32.totalorder %v178, 2
        %vm199 = vcmp.lt.s32.totalorder %v178, 3
        %vm200 = vcmp.lt.s32.totalorder %v178, 4
        %v201 = vsel %vm197, %v181, %v184
        %v202 = vsel %vm200, %v190, 2102212464
        %v203 = vsel %vm199, %v187, %v202
        %v204 = vsel %vm198, %v201, %v203
        %v205 = vsel %vm197, %v184, %v187
        %v206 = vsel %vm200, %v193, 920167782
        %v207 = vsel %vm199, %v190, %v206
        %v208 = vsel %vm198, %v205, %v207
        %v209 = vsel %vm197, %v187, %v190
        %v210 = vsel %vm200, %v196, 1326507024
        %v211 = vsel %vm199, %v193, %v210
        %v212 = vsel %vm198, %v209, %v211
        %v213 = vshll.u32 %v173, 8
        %v214 = vmul.u32.u64.compose %v213, %v212
        %v215 = vextract.low.u32 %v214
        %v216 = vextract.high.u32 %v214
        %v217 = vmul.u32.u64.compose %v213, %v208
        %v218 = vextract.low.u32 %v217
        %v219 = vextract.high.u32 %v217
        %v220 = vmul.u32 %v213, %v204
        %v221 = vadd.s32 %v216, %v218
        %vm222 = vc.u32 %v216, %v218
        %v223 = vadd.s32 %v219, 1
        %v224 = vsel %vm222, %v223, %v219
        %v225 = vadd.s32 %v220, %v224
        %v226 = vadd.s32 %v225, 536870912
        %v227 = vshrl.u32 %v226, 30
        %v228 = vshll.u32 %v227, 30
        %v229 = vsub.s32 %v225, %v228
        %vm230 = vcmp.lt.s32.totalorder %v229, 0
        %v231 = vsub.s32 0, %v229
        %v232 = vsel %vm230, %v231, %v229
        %v233 = vclz %v232
        %v234 = vsub.s32 %v233, 2
        %vm235 = vcmp.gt.s32.totalorder 0, %v234
        %v236 = vsel %vm235, 0, %v234
        %v237 = vsub.s32 32, %v236
        %v238 = vshll.u32 %v229, %v236
        %v239 = vshrl.u32 %v221, %v237
        %v240 = vor.u32 %v238, %v239
        %v241 = vsub.s32 4294967266, %v236
        %v242 = vadd.s32 %v241, 127
        %v243 = vshll.u32 %v242, 23
        %v244 = vor.u32 4788187, %v243
        %v245 = vand.u32 2147483647, %v244
        %v247 = vcvt.s32.f32 %v240
        %v248 = vmul.f32 %v247, %v245
        %v249 = vxor.u32 %v248, 2147483648
        %v250 = vsel %vm167, %v249, %v248
        %v251 = vsub.s32 4, %v227
        %v252 = vsel %vm167, %v251, %v227
        %v253 = vsel %vm166, %v164, %v250
        %v254 = vsel %vm166, 0, %v252
        %v255 = vcosq.f32.pop %v253
        %v256 = vsinq.f32.pop %v253
        %vm257 = vweird.f32 %v164
        %v258 = vadd.s32 %v254, 3
        %v259 = vand.u32 %v258, 3
        %vm260 = vcmp.lt.s32.totalorder %v259, 2
        %vm261 = vcmp.eq.s32.totalorder %v259, 0
        %v262 = vxor.u32 %v256, 2147483648
        %v263 = vsel %vm261, %v255, %v262
        %vm264 = vcmp.eq.s32.totalorder %v259, 2
        %v265 = vxor.u32 %v255, 2147483648
        %v266 = vsel %vm264, %v265, %v256
        %v267 = vsel %vm260, %v263, %v266
        %v268 = vsel %vm257, nan, %v267
        %v269 = vand.u32 2147483647, %v164
        %vm270 = vcmp.le.f32.partialorder %v269, 0.7853982
        %vm271 = vcmp.lt.s32.totalorder %v164, 0
        %v272 = vand.u32 %v164, 2139095040
        %v273 = vshrl.u32 %v272, 23
        %v274 = vsub.s32 %v273, 127
        %v275 = vand.u32 2147483647, %v164
        %v276 = vand.u32 %v275, 8388607
        %v277 = vor.u32 %v276, 8388608
        %v278 = vsub.s32 0, %v277
        %v279 = vadd.s32 %v274, 1
        %vm280 = vcmp.gt.s32.totalorder %v279, 0
        %v281 = vsel %vm280, %v279, 0
        %v282 = vshrl.u32 %v281, 5
        %v283 = vand.u32 %v281, 31
        %v284 = vsub.s32 32, %v283
        %v285 = vshrl.u32 683565275, %v284
        %v286 = vshll.u32 683565275, %v283
        %v287 = vshrl.u32 2475754826, %v284
        %v288 = vor.u32 %v286, %v287
        %v289 = vshll.u32 2475754826, %v283
        %v290 = vshrl.u32 2131351028, %v284
        %v291 = vor.u32 %v289, %v290
        %v292 = vshll.u32 2131351028, %v283
        %v293 = vshrl.u32 2102212464, %v284
        %v294 = vor.u32 %v292, %v293
        %v295 = vshll.u32 2102212464, %v283
        %v296 = vshrl.u32 920167782, %v284
        %v297 = vor.u32 %v295, %v296
        %v298 = vshll.u32 920167782, %v283
        %v299 = vshrl.u32 1326507024, %v284
        %v300 = vor.u32 %v298, %v299
        %vm301 = vcmp.lt.s32.totalorder %v282, 1
        %vm302 = vcmp.lt.s32.totalorder %v282, 2
        %vm303 = vcmp.lt.s32.totalorder %v282, 3
        %vm304 = vcmp.lt.s32.totalorder %v282, 4
        %v305 = vsel %vm301, %v285, %v288
        %v306 = vsel %vm304, %v294, 2102212464
        %v307 = vsel %vm303, %v291, %v306
        %v308 = vsel %vm302, %v305, %v307
        %v309 = vsel %vm301, %v288, %v291
        %v310 = vsel %vm304, %v297, 920167782
        %v311 = vsel %vm303, %v294, %v310
        %v312 = vsel %vm302, %v309, %v311
        %v313 = vsel %vm301, %v291, %v294
        %v314 = vsel %vm304, %v300, 1326507024
        %v315 = vsel %vm303, %v297, %v314
        %v316 = vsel %vm302, %v313, %v315
        %v317 = vshll.u32 %v277, 8
        %v318 = vmul.u32.u64.compose %v317, %v316
        %v319 = vextract.low.u32 %v318
        %v320 = vextract.high.u32 %v318
        %v321 = vmul.u32.u64.compose %v317, %v312
        %v322 = vextract.low.u32 %v321
        %v323 = vextract.high.u32 %v321
        %v324 = vmul.u32 %v317, %v308
        %v325 = vadd.s32 %v320, %v322
        %vm326 = vc.u32 %v320, %v322
        %v327 = vadd.s32 %v323, 1
        %v328 = vsel %vm326, %v327, %v323
        %v329 = vadd.s32 %v324, %v328
        %v330 = vadd.s32 %v329, 536870912
        %v331 = vshrl.u32 %v330, 30
        %v332 = vshll.u32 %v331, 30
        %v333 = vsub.s32 %v329, %v332
        %vm334 = vcmp.lt.s32.totalorder %v333, 0
        %v335 = vsub.s32 0, %v333
        %v336 = vsel %vm334, %v335, %v333
        %v337 = vclz %v336
        %v338 = vsub.s32 %v337, 2
        %vm339 = vcmp.gt.s32.totalorder 0, %v338
        %v340 = vsel %vm339, 0, %v338
        %v341 = vsub.s32 32, %v340
        %v342 = vshll.u32 %v333, %v340
        %v343 = vshrl.u32 %v325, %v341
        %v344 = vor.u32 %v342, %v343
        %v345 = vsub.s32 4294967266, %v340
        %v346 = vadd.s32 %v345, 127
        %v347 = vshll.u32 %v346, 23
        %v348 = vor.u32 4788187, %v347
        %v349 = vand.u32 2147483647, %v348
        %v351 = vcvt.s32.f32 %v344
        %v352 = vmul.f32 %v351, %v349
        %v353 = vxor.u32 %v352, 2147483648
        %v354 = vsel %vm271, %v353, %v352
        %v355 = vsub.s32 4, %v331
        %v356 = vsel %vm271, %v355, %v331
        %v357 = vsel %vm270, %v164, %v354
        %v358 = vsel %vm270, 0, %v356
        %v359 = vcosq.f32.pop %v357
        %v360 = vsinq.f32.pop %v357
        %vm361 = vweird.f32 %v164
        %v362 = vand.u32 %v358, 3
        %vm363 = vcmp.lt.s32.totalorder %v362, 2
        %vm364 = vcmp.eq.s32.totalorder %v362, 0
        %v365 = vxor.u32 %v360, 2147483648
        %v366 = vsel %vm364, %v359, %v365
        %vm367 = vcmp.eq.s32.totalorder %v362, 2
        %v368 = vxor.u32 %v359, 2147483648
        %v369 = vsel %vm367, %v368, %v360
        %v370 = vsel %vm363, %v366, %v369
        %v371 = vsel %vm361, nan, %v370
        %373 = vrot.lane.b32.xlu0 %v371, 16
        %v374 = vpop.permute.xlu0 %373
        %vm376 = vcmask 130048
        %v377 = vsel %vm376, %v268, %v374
        %v378 = vmul.f32 %v377, %v157
        %vm379 = vcmask 261120
        %380 = vst.msk [vmem:[%s128] sm:$0xff] %vm379, %v378
        %s381 = sand.u32 %s52, 1
        %s382 = scalar_lea.sflag [#allocation4], %s381
        %s383 = sand.u32 %s52, 1
        %s384 = smul.addr %s383, 8
        %s385 = scalar_lea.vmem [#allocation5], %s384
        // Predicated region
        $region29: #{tpu_custom_call.1} parent=23 // pred_check
          %p386 = pneg %p62
        $region30: #{tpu_custom_call.1} parent=23 // pred_check_branch
          %388 = sbr.rel (%p386) target = $region32
        $region31: #{tpu_custom_call.1} parent=23 // pred_region
          %s390 = ssub.s32 128, 128
          %391 = vsyncadd %s382, %s390
          %s392 = smul.addr %s18, 128
          %s393 = scalar_lea.hbm %s1, %s392
          %s395 = sshll.u32 %s385, 4
          %s396 = int_to_ptr.vmem [resolvable:$true] %s395
          %398 = dma.vmem_to_hbm [thread:$0]  %s396, 128, %s393, %s382
        $region32: #{tpu_custom_call.1} parent=23 // pred_fallthru
          _
      $region24: #{tpu_custom_call.1} parent=5 // pred_fallthru
        _
      %p399 = scmp.le.s32.totalorder 2, %s13
      // Predicated region
      $region33: #{tpu_custom_call.1} parent=5 // pred_check
        %p400 = pneg %p399
      $region34: #{tpu_custom_call.1} parent=5 // pred_check_branch
        %402 = sbr.rel (%p400) target = $region36
      $region35: #{tpu_custom_call.1} parent=5 // pred_region
        %s403 = ssub.s32 %s13, 2
        // Predicated region
        $region37: #{tpu_custom_call.1} parent=35 // pred_check
          %p404 = pneg %p68
        $region38: #{tpu_custom_call.1} parent=35 // pred_check_branch
          %406 = sbr.rel (%p404) target = $region40
        $region39: #{tpu_custom_call.1} parent=35 // pred_region
          %s407 = sand.u32 %s53, 1
          %s408 = scalar_lea.sflag [#allocation4], %s407
          %s409 = sand.u32 %s53, 1
          %s410 = smul.addr %s409, 8
          %s411 = scalar_lea.vmem [#allocation5], %s410
          %412 = dma.done %s408, 128
        $region40: #{tpu_custom_call.1} parent=35 // pred_fallthru
          _
      $region36: #{tpu_custom_call.1} parent=5 // pred_fallthru
        _
    $region6: #{tpu_custom_call.1} parent=1 // loop_footer
      %s17 = sadd.s32 1, %s13
    $region7: #{tpu_custom_call.1} parent=1 // loop_footer_branch
      %12 = sbr.rel target = $region3
    $region8: #{tpu_custom_call.1} parent=1 // loop_exit
      _
    %413 = vsyncpa [#allocation3], 1
    %s414 = scalar_lea.sflag [#allocation3], 1
    %415 = vsyncpa %s414, 1
    %416 = vsyncpa [#allocation4], 1
    %s417 = scalar_lea.sflag [#allocation4], 1
    %418 = vsyncpa %s417, 1

</llo_original>
